<compile_context>
chip_gen: v5e
topology: v5e:2x2
jax: 0.10.0
libtpu: 0.0.40
codegen_flags: <defaults>
</compile_context>

<pallas_src>
import jax
import jax.numpy as jnp
import numpy as np
from jax.experimental import pallas as pl
from jax.experimental.pallas import tpu as pltpu


def critic_kernel(x_ref, a_ref, wx_ref, wa_ref, b1_ref, w2_ref, w3t_ref,
                  b3t_ref, w4t_ref, b2_ref, b4_ref, o_ref):
    """One batch block (TB rows) per grid step.

    x_ref  : (TB, P*F)  lane-dense activations (players*features on lanes)
    a_ref  : (TB, P)
    wx_ref : (P*F, P*H) block-diag expansion of embedding Linear (x part)
    wa_ref : (P,   P*H) block-diag expansion of embedding Linear (a column)
    b1_ref : (1,   P*H) f32
    w2_ref : (P*H, P)   block-diag expansion of Linear(H -> 1)
    w3t_ref: (H, P)     fc Linear #1, transposed
    b3t_ref: (H, 1)     f32
    w4t_ref: (1, H)     fc Linear #2, transposed
    b2_ref, b4_ref : (1, 1) f32 scalars in SMEM
    o_ref  : (1, TB)    lane-dense output block
    """
    f32 = jnp.float32
    cdt = x_ref.dtype  # MXU operand dtype (f32, or bf16 on v6e/v7x)

    # Stage 1: concat([x, a]) @ W1 == x @ W1[:F] + a * W1[F], done for all P
    # players at once via block-diagonal weights (no concat, no player loop).
    h = jnp.dot(x_ref[...], wx_ref[...], preferred_element_type=f32)
    h = h + jnp.dot(a_ref[...], wa_ref[...], preferred_element_type=f32)
    h = jnp.maximum(h + b1_ref[...], 0.0)                       # (TB, P*H) f32

    # Stage 2: per-player Linear(H -> 1), still a single matmul.
    emb = jnp.dot(h.astype(cdt), w2_ref[...],
                  preferred_element_type=f32) + b2_ref[0, 0]    # (TB, P) f32

    # Stages 3-4 computed transposed so batch lands on the lane axis and the
    # final store is lane-dense (no (TB, 1) masked stores, no emb relayout
    # between the matmul chains beyond this one small XLU transpose).
    emb_t = jnp.transpose(emb).astype(cdt)                      # (P, TB)
    g_t = jnp.dot(w3t_ref[...], emb_t,
                  preferred_element_type=f32) + b3t_ref[...]    # (H, TB) f32
    g_t = jnp.maximum(g_t, 0.0)
    o_t = jnp.dot(w4t_ref[...], g_t.astype(cdt),
                  preferred_element_type=f32) + b4_ref[0, 0]    # (1, TB) f32

    o_ref[...] = jax.nn.sigmoid(o_t)


def init_params(key, feature_dim, player_dim, hidden_dim=32):
    """Deterministic synthetic parameters (stored as (in, out) matrices)."""
    H = hidden_dim // 2
    ks = jax.random.split(key, 8)
    w1 = jax.random.normal(ks[0], (feature_dim + 1, H), jnp.float32) * 0.1
    b1 = jax.random.normal(ks[1], (H,), jnp.float32) * 0.1
    w2 = jax.random.normal(ks[2], (H, 1), jnp.float32) * 0.1
    b2 = jax.random.normal(ks[3], (1,), jnp.float32) * 0.1
    w3 = jax.random.normal(ks[4], (player_dim, H), jnp.float32) * 0.1
    b3 = jax.random.normal(ks[5], (H,), jnp.float32) * 0.1
    w4 = jax.random.normal(ks[6], (H, 1), jnp.float32) * 0.1
    b4 = jax.random.normal(ks[7], (1,), jnp.float32) * 0.1
    return (w1, b1, w2, b2, w3, b3, w4, b4)


def critic_forward(x, a, params, *, mxu_dtype=jnp.float32, block_b=256):
    B, P, F = x.shape
    w1, b1, w2, b2, w3, b3, w4, b4 = params
    H = w1.shape[1]
    PF, PH = P * F, P * H
    cdt = jnp.dtype(mxu_dtype)

    # --- lane-dense activations (free contiguous reshape; no concat) ---
    x2 = x.reshape(B, PF).astype(cdt)
    a2 = a.astype(cdt)                                   # (B, P)

    # --- weights: split off the concat column + block-diag expansion over P ---
    w1x, w1a = w1[:F], w1[F:F + 1]                       # (F, H), (1, H)
    eye = jnp.eye(P, dtype=w1.dtype)
    wx_big = jnp.einsum('pq,fh->pfqh', eye, w1x).reshape(PF, PH).astype(cdt)
    wa_big = jnp.einsum('pq,xh->pqh', eye, w1a).reshape(P, PH).astype(cdt)
    w2_big = jnp.einsum('pq,hx->phqx', eye, w2).reshape(PH, P).astype(cdt)
    b1_big = jnp.tile(b1, P).reshape(1, PH).astype(jnp.float32)
    w3t = w3.T.astype(cdt)                               # (H, P)
    b3t = b3.reshape(H, 1).astype(jnp.float32)
    w4t = w4.T.astype(cdt)                               # (1, H)
    b2s = b2.reshape(1, 1).astype(jnp.float32)
    b4s = b4.reshape(1, 1).astype(jnp.float32)

    # --- batch grid: TB rows per step; pad so every block is full ---
    TB = B if B <= block_b else block_b
    Bp = TB * pl.cdiv(B, TB)
    if Bp != B:
        x2 = jnp.pad(x2, ((0, Bp - B), (0, 0)))
        a2 = jnp.pad(a2, ((0, Bp - B), (0, 0)))
    grid = (Bp // TB,)

    row = lambda i: (i, 0)
    const = lambda i: (0, 0)
    smem = pl.BlockSpec(memory_space=pltpu.MemorySpace.SMEM)
    in_specs = [
        pl.BlockSpec((TB, PF), row),       # x2  (streamed, double-buffered)
        pl.BlockSpec((TB, P), row),        # a2  (streamed)
        pl.BlockSpec((PF, PH), const),     # wx_big (resident)
        pl.BlockSpec((P, PH), const),      # wa_big
        pl.BlockSpec((1, PH), const),      # b1_big
        pl.BlockSpec((PH, P), const),      # w2_big
        pl.BlockSpec((H, P), const),       # w3t
        pl.BlockSpec((H, 1), const),       # b3t
        pl.BlockSpec((1, H), const),       # w4t
        smem,                              # b2 scalar
        smem,                              # b4 scalar
    ]
    out_specs = pl.BlockSpec((1, TB), lambda i: (0, i))

    isz = cdt.itemsize
    flops = 2 * Bp * (PF * PH + P * PH + PH * P + P * H + H)
    bytes_accessed = (Bp * (PF + P) * isz                          # activations
                      + (PF * PH + P * PH + PH * P + H * P + H) * isz  # weights
                      + (PH + H + 2) * 4                           # f32 biases
                      + Bp * 4)                                    # output
    cost = pl.CostEstimate(flops=flops, transcendentals=Bp,
                           bytes_accessed=bytes_accessed)

    out = pl.pallas_call(
        critic_kernel,
        out_shape=jax.ShapeDtypeStruct((1, Bp), jnp.float32),
        grid=grid,
        in_specs=in_specs,
        out_specs=out_specs,
        compiler_params=pltpu.CompilerParams(
            dimension_semantics=("parallel",),
            vmem_limit_bytes=32 * 1024 * 1024,
        ),
        cost_estimate=cost,
    )(x2, a2, wx_big, wa_big, b1_big, w2_big, w3t, b3t, w4t, b2s, b4s)

    return out[0, :B]                                    # .squeeze(-1) -> (B,)


def critic_ref(x, a, params):
    """Pure-JAX reference mirroring the PyTorch forward exactly."""
    w1, b1, w2, b2, w3, b3, w4, b4 = params
    data = jnp.concatenate([x, a[..., None]], axis=-1)
    h = jax.nn.relu(data @ w1 + b1)
    emb = (h @ w2 + b2)[..., 0]
    g = jax.nn.relu(emb @ w3 + b3)
    return jax.nn.sigmoid(g @ w4 + b4)[..., 0]


if __name__ == "__main__":
    feature_dim, player_dim, hidden_dim = 4, 8, 32

    key = jax.random.PRNGKey(0)
    kp, kx, ka, kx2, ka2 = jax.random.split(key, 5)
    params = init_params(kp, feature_dim, player_dim, hidden_dim)

    # Small shape (single grid step), exact f32 path.
    B = 2
    x = jax.random.normal(kx, (B, player_dim, feature_dim), jnp.float32)
    a = jax.random.normal(ka, (B, player_dim), jnp.float32)
    out = jax.block_until_ready(critic_forward(x, a, params))
    ref = jax.block_until_ready(critic_ref(x, a, params))
    assert out.shape == (B,)
    np.testing.assert_allclose(np.asarray(out), np.asarray(ref),
                               rtol=1e-5, atol=1e-5)

    # Larger batch exercising the multi-step pipelined "parallel" grid (f32).
    B2 = 512
    xl = jax.random.normal(kx2, (B2, player_dim, feature_dim), jnp.float32)
    al = jax.random.normal(ka2, (B2, player_dim), jnp.float32)
    out2 = jax.block_until_ready(critic_forward(xl, al, params))
    ref2 = jax.block_until_ready(critic_ref(xl, al, params))
    np.testing.assert_allclose(np.asarray(out2), np.asarray(ref2),
                               rtol=1e-5, atol=1e-5)

    # bf16 MXU-operand fast path (v6e/v7x); f32 accumulation, looser tolerance.
    out3 = jax.block_until_ready(
        critic_forward(xl, al, params, mxu_dtype=jnp.bfloat16))
    np.testing.assert_allclose(np.asarray(out3), np.asarray(ref2),
                               rtol=5e-2, atol=2e-2)

    print("KERNEL_OK")
</pallas_src>

<mosaic_0001>
module attributes {stable_mosaic.version = 11 : i64} {
  func.func @critic_kernel(%arg0: i32, %arg1: memref<2x32xf32, #tpu.memory_space<vmem>>, %arg2: memref<2x8xf32, #tpu.memory_space<vmem>>, %arg3: memref<32x128xf32, #tpu.memory_space<vmem>>, %arg4: memref<8x128xf32, #tpu.memory_space<vmem>>, %arg5: memref<1x128xf32, #tpu.memory_space<vmem>>, %arg6: memref<128x8xf32, #tpu.memory_space<vmem>>, %arg7: memref<16x8xf32, #tpu.memory_space<vmem>>, %arg8: memref<16x1xf32, #tpu.memory_space<vmem>>, %arg9: memref<1x16xf32, #tpu.memory_space<vmem>>, %arg10: memref<1x1xf32, #tpu.memory_space<smem>>, %arg11: memref<1x1xf32, #tpu.memory_space<smem>>, %arg12: memref<1x2xf32, #tpu.memory_space<vmem>>) attributes {dimension_semantics = [#tpu.dimension_semantics<parallel>], iteration_bounds = array<i64: 1>, scalar_prefetch = 0 : i64, scratch_operands = 0 : i64, tpu.core_type = #tpu.core_type<tc>, window_params = [{transform_indices = @transform_0, window_bounds = array<i64: 2, 32>}, {transform_indices = @transform_1, window_bounds = array<i64: 2, 8>}, {pipeline_mode = #tpu.pipeline_mode<synchronous>, transform_indices = @transform_2, window_bounds = array<i64: 32, 128>}, {pipeline_mode = #tpu.pipeline_mode<synchronous>, transform_indices = @transform_3, window_bounds = array<i64: 8, 128>}, {pipeline_mode = #tpu.pipeline_mode<synchronous>, transform_indices = @transform_4, window_bounds = array<i64: 1, 128>}, {pipeline_mode = #tpu.pipeline_mode<synchronous>, transform_indices = @transform_5, window_bounds = array<i64: 128, 8>}, {pipeline_mode = #tpu.pipeline_mode<synchronous>, transform_indices = @transform_6, window_bounds = array<i64: 16, 8>}, {pipeline_mode = #tpu.pipeline_mode<synchronous>, transform_indices = @transform_7, window_bounds = array<i64: 16, 1>}, {pipeline_mode = #tpu.pipeline_mode<synchronous>, transform_indices = @transform_8, window_bounds = array<i64: 1, 16>}, {transform_indices = @transform_9, window_bounds = array<i64: 1, 1>}, {transform_indices = @transform_10, window_bounds = array<i64: 1, 1>}, {transform_indices = @transform_11, window_bounds = array<i64: 1, 2>}]} {
    %c0 = arith.constant 0 : index
    %c0_0 = arith.constant 0 : index
    %0 = vector.load %arg1[%c0, %c0_0] : memref<2x32xf32, #tpu.memory_space<vmem>>, vector<2x32xf32>
    %c0_1 = arith.constant 0 : index
    %c0_2 = arith.constant 0 : index
    %1 = vector.load %arg3[%c0_1, %c0_2] : memref<32x128xf32, #tpu.memory_space<vmem>>, vector<32x128xf32>
    %cst = arith.constant dense<0.000000e+00> : vector<2x128xf32>
    %2 = tpu.matmul %0, %1, %cst {dimension_numbers = #tpu.dot_dimension_numbers<[1], [0], [0], [1], [0, 0, 1, 1], [], []>} : vector<2x32xf32>, vector<32x128xf32>, vector<2x128xf32> -> vector<2x128xf32>
    %c0_3 = arith.constant 0 : index
    %c0_4 = arith.constant 0 : index
    %3 = vector.load %arg2[%c0_3, %c0_4] : memref<2x8xf32, #tpu.memory_space<vmem>>, vector<2x8xf32>
    %c0_5 = arith.constant 0 : index
    %c0_6 = arith.constant 0 : index
    %4 = vector.load %arg4[%c0_5, %c0_6] : memref<8x128xf32, #tpu.memory_space<vmem>>, vector<8x128xf32>
    %cst_7 = arith.constant dense<0.000000e+00> : vector<2x128xf32>
    %5 = tpu.matmul %3, %4, %cst_7 {dimension_numbers = #tpu.dot_dimension_numbers<[1], [0], [0], [1], [0, 0, 1, 1], [], []>} : vector<2x8xf32>, vector<8x128xf32>, vector<2x128xf32> -> vector<2x128xf32>
    %6 = arith.addf %2, %5 : vector<2x128xf32>
    %c0_8 = arith.constant 0 : index
    %c0_9 = arith.constant 0 : index
    %7 = vector.load %arg5[%c0_8, %c0_9] : memref<1x128xf32, #tpu.memory_space<vmem>>, vector<1x128xf32>
    %8 = vector.broadcast %7 : vector<1x128xf32> to vector<2x128xf32>
    %9 = arith.addf %6, %8 : vector<2x128xf32>
    %cst_10 = arith.constant 0.000000e+00 : f32
    %10 = vector.broadcast %cst_10 : f32 to vector<2x128xf32>
    %11 = arith.maximumf %9, %10 : vector<2x128xf32>
    %c0_11 = arith.constant 0 : index
    %c0_12 = arith.constant 0 : index
    %12 = vector.load %arg6[%c0_11, %c0_12] : memref<128x8xf32, #tpu.memory_space<vmem>>, vector<128x8xf32>
    %cst_13 = arith.constant dense<0.000000e+00> : vector<2x8xf32>
    %13 = tpu.matmul %11, %12, %cst_13 {dimension_numbers = #tpu.dot_dimension_numbers<[1], [0], [0], [1], [0, 0, 1, 1], [], []>} : vector<2x128xf32>, vector<128x8xf32>, vector<2x8xf32> -> vector<2x8xf32>
    %c0_14 = arith.constant 0 : index
    %c0_15 = arith.constant 0 : index
    %14 = memref.load %arg10[%c0_14, %c0_15] : memref<1x1xf32, #tpu.memory_space<smem>>
    %15 = vector.broadcast %14 : f32 to vector<2x8xf32>
    %16 = arith.addf %13, %15 : vector<2x8xf32>
    %17 = tpu.transpose %16, [1, 0] : vector<2x8xf32> -> vector<8x2xf32>
    %c0_16 = arith.constant 0 : index
    %c0_17 = arith.constant 0 : index
    %18 = vector.load %arg7[%c0_16, %c0_17] : memref<16x8xf32, #tpu.memory_space<vmem>>, vector<16x8xf32>
    %cst_18 = arith.constant dense<0.000000e+00> : vector<16x2xf32>
    %19 = tpu.matmul %18, %17, %cst_18 {dimension_numbers = #tpu.dot_dimension_numbers<[1], [0], [0], [1], [0, 0, 1, 1], [], []>} : vector<16x8xf32>, vector<8x2xf32>, vector<16x2xf32> -> vector<16x2xf32>
    %c0_19 = arith.constant 0 : index
    %c0_20 = arith.constant 0 : index
    %20 = vector.load %arg8[%c0_19, %c0_20] : memref<16x1xf32, #tpu.memory_space<vmem>>, vector<16x1xf32>
    %21 = vector.broadcast %20 : vector<16x1xf32> to vector<16x2xf32>
    %22 = arith.addf %19, %21 : vector<16x2xf32>
    %cst_21 = arith.constant 0.000000e+00 : f32
    %23 = vector.broadcast %cst_21 : f32 to vector<16x2xf32>
    %24 = arith.maximumf %22, %23 : vector<16x2xf32>
    %c0_22 = arith.constant 0 : index
    %c0_23 = arith.constant 0 : index
    %25 = vector.load %arg9[%c0_22, %c0_23] : memref<1x16xf32, #tpu.memory_space<vmem>>, vector<1x16xf32>
    %cst_24 = arith.constant dense<0.000000e+00> : vector<1x2xf32>
    %26 = tpu.matmul %25, %24, %cst_24 {dimension_numbers = #tpu.dot_dimension_numbers<[1], [0], [0], [1], [0, 0, 1, 1], [], []>} : vector<1x16xf32>, vector<16x2xf32>, vector<1x2xf32> -> vector<1x2xf32>
    %c0_25 = arith.constant 0 : index
    %c0_26 = arith.constant 0 : index
    %27 = memref.load %arg11[%c0_25, %c0_26] : memref<1x1xf32, #tpu.memory_space<smem>>
    %28 = vector.broadcast %27 : f32 to vector<1x2xf32>
    %29 = arith.addf %26, %28 : vector<1x2xf32>
    %30 = arith.negf %29 : vector<1x2xf32>
    %31 = math.exp %30 : vector<1x2xf32>
    %cst_27 = arith.constant 1.000000e+00 : f32
    %32 = vector.broadcast %cst_27 : f32 to vector<1x2xf32>
    %33 = arith.addf %32, %31 : vector<1x2xf32>
    %34 = arith.divf %32, %33 : vector<1x2xf32>
    %c0_28 = arith.constant 0 : index
    %c0_29 = arith.constant 0 : index
    %35 = vector.load %arg12[%c0_28, %c0_29] : memref<1x2xf32, #tpu.memory_space<vmem>>, vector<1x2xf32>
    tpu.vector_store %arg12[%c0_28, %c0_29], %34 {strides = array<i32>} : memref<1x2xf32, #tpu.memory_space<vmem>>, vector<1x2xf32>,
    return
  }
  func.func @transform_0(%arg0: i32) -> (i32, i32) {
    %c0_i32 = arith.constant 0 : i32
    %c0_i32_0 = arith.constant 0 : i32
    return %arg0, %c0_i32 : i32, i32
  }
  func.func @transform_1(%arg0: i32) -> (i32, i32) {
    %c0_i32 = arith.constant 0 : i32
    %c0_i32_0 = arith.constant 0 : i32
    return %arg0, %c0_i32 : i32, i32
  }
  func.func @transform_2(%arg0: i32) -> (i32, i32) {
    %c0_i32 = arith.constant 0 : i32
    %c0_i32_0 = arith.constant 0 : i32
    %c0_i32_1 = arith.constant 0 : i32
    return %c0_i32, %c0_i32_0 : i32, i32
  }
  func.func @transform_3(%arg0: i32) -> (i32, i32) {
    %c0_i32 = arith.constant 0 : i32
    %c0_i32_0 = arith.constant 0 : i32
    %c0_i32_1 = arith.constant 0 : i32
    return %c0_i32, %c0_i32_0 : i32, i32
  }
  func.func @transform_4(%arg0: i32) -> (i32, i32) {
    %c0_i32 = arith.constant 0 : i32
    %c0_i32_0 = arith.constant 0 : i32
    %c0_i32_1 = arith.constant 0 : i32
    return %c0_i32, %c0_i32_0 : i32, i32
  }
  func.func @transform_5(%arg0: i32) -> (i32, i32) {
    %c0_i32 = arith.constant 0 : i32
    %c0_i32_0 = arith.constant 0 : i32
    %c0_i32_1 = arith.constant 0 : i32
    return %c0_i32, %c0_i32_0 : i32, i32
  }
  func.func @transform_6(%arg0: i32) -> (i32, i32) {
    %c0_i32 = arith.constant 0 : i32
    %c0_i32_0 = arith.constant 0 : i32
    %c0_i32_1 = arith.constant 0 : i32
    return %c0_i32, %c0_i32_0 : i32, i32
  }
  func.func @transform_7(%arg0: i32) -> (i32, i32) {
    %c0_i32 = arith.constant 0 : i32
    %c0_i32_0 = arith.constant 0 : i32
    %c0_i32_1 = arith.constant 0 : i32
    return %c0_i32, %c0_i32_0 : i32, i32
  }
  func.func @transform_8(%arg0: i32) -> (i32, i32) {
    %c0_i32 = arith.constant 0 : i32
    %c0_i32_0 = arith.constant 0 : i32
    %c0_i32_1 = arith.constant 0 : i32
    return %c0_i32, %c0_i32_0 : i32, i32
  }
  func.func @transform_9(%arg0: i32) -> (i32, i32) {
    %c0_i32 = arith.constant 0 : i32
    %c0_i32_0 = arith.constant 0 : i32
    %c0_i32_1 = arith.constant 0 : i32
    return %c0_i32, %c0_i32_0 : i32, i32
  }
  func.func @transform_10(%arg0: i32) -> (i32, i32) {
    %c0_i32 = arith.constant 0 : i32
    %c0_i32_0 = arith.constant 0 : i32
    %c0_i32_1 = arith.constant 0 : i32
    return %c0_i32, %c0_i32_0 : i32, i32
  }
  func.func @transform_11(%arg0: i32) -> (i32, i32) {
    %c0_i32 = arith.constant 0 : i32
    %c0_i32_0 = arith.constant 0 : i32
    return %c0_i32, %arg0 : i32, i32
  }
}

</mosaic_0001>

<llo_original>
// kernel: tpu_custom_call.1
$region0: #{tpu_custom_call.1}
  #allocation0 [shape = 'u32[]', space=smem, size = 0x4, offset = 0x4, fixed_abs, tag = 'smem constant byte address 0x4 - core index']
  #allocation1 [shape = 'u32[72,128]{1,0:T(1,128)}', space=vmem, size = 0x9000, scoped, tag = 'internal scratch']
  #allocation2 [shape = 'f32[1,1]{1,0:T(1,128)S(6)}', space=smem, size = 0x200, scoped, tag = 'scoped memory for tpu_custom_call.1']
  #allocation3 [shape = 'f32[1,1]{1,0:T(1,128)S(6)}', space=smem, size = 0x200, scoped, tag = 'scoped memory for tpu_custom_call.1']
  %s0 = inlined_call_operand.vmem [shape: f32[2,32], index: 0, kind: input, shape index: {}]
  %s1 = inlined_call_operand.vmem [shape: f32[2,8], index: 1, kind: input, shape index: {}]
  %s2 = inlined_call_operand.vmem [shape: f32[32,128], index: 2, kind: input, shape index: {}]
  %s3 = inlined_call_operand.vmem [shape: f32[8,128], index: 3, kind: input, shape index: {}]
  %s4 = inlined_call_operand.vmem [shape: f32[1,128], index: 4, kind: input, shape index: {}]
  %s5 = inlined_call_operand.vmem [shape: f32[128,8], index: 5, kind: input, shape index: {}]
  %s6 = inlined_call_operand.vmem [shape: f32[16,8], index: 6, kind: input, shape index: {}]
  %s7 = inlined_call_operand.vmem [shape: f32[16,1], index: 7, kind: input, shape index: {}]
  %s8 = inlined_call_operand.vmem [shape: f32[1,16], index: 8, kind: input, shape index: {}]
  %s9 = inlined_call_operand.<no memory space> [shape: f32[1,1], index: 9, kind: input, shape index: {}]
  %s10 = inlined_call_operand.<no memory space> [shape: f32[1,1], index: 10, kind: input, shape index: {}]
  %s11 = inlined_call_operand.hbm [shape: f32[1,2], index: 11, kind: output, shape index: {}]
  %s12 = sld [smem:[#allocation0]]
  $region54: #{tpu_custom_call.1} parent=0
    _
  %s14 = ssub.s32 1, %s12
  %s15 = scalar_select 0, %s14, %s12
  %16 = sst [smem:[#allocation2]] %s9
  %17 = sst [smem:[#allocation3]] %s10
  $region1: #{tpu_custom_call.1} parent=0
    #allocation4 [shape = 'u8[512]{0}', space=vmem, size = 0x400, scoped, tag = 'output window, operand 0, single buffered']
    #allocation5 [shape = 's32[1]{0}', space=sflag, size = 0x4, scoped, tag = 'scoped memory for tpu_custom_call.1']
    %18 = vsyncpa [#allocation5], 0
    // Predicated region
    $region2: #{tpu_custom_call.1} parent=1 // pred_check
      _
    $region3: #{tpu_custom_call.1} parent=1 // pred_check_branch
      %20 = sbr.rel (0) target = $region5
    $region4: #{tpu_custom_call.1} parent=1 // pred_region
      _
    $region5: #{tpu_custom_call.1} parent=1 // pred_fallthru
      _
    // Predicated region
    $region6: #{tpu_custom_call.1} parent=1 // pred_check
      _
    $region7: #{tpu_custom_call.1} parent=1 // pred_check_branch
      %22 = sbr.rel (0) target = $region9
    $region8: #{tpu_custom_call.1} parent=1 // pred_region
      _
    $region9: #{tpu_custom_call.1} parent=1 // pred_fallthru
      _
    // Predicated region
    $region10: #{tpu_custom_call.1} parent=1 // pred_check
      _
    $region11: #{tpu_custom_call.1} parent=1 // pred_check_branch
      %24 = sbr.rel (0) target = $region13
    $region12: #{tpu_custom_call.1} parent=1 // pred_region
      _
    $region13: #{tpu_custom_call.1} parent=1 // pred_fallthru
      _
    // Predicated region
    $region14: #{tpu_custom_call.1} parent=1 // pred_check
      _
    $region15: #{tpu_custom_call.1} parent=1 // pred_check_branch
      %26 = sbr.rel (0) target = $region17
    $region16: #{tpu_custom_call.1} parent=1 // pred_region
      _
    $region17: #{tpu_custom_call.1} parent=1 // pred_fallthru
      _
    // Predicated region
    $region18: #{tpu_custom_call.1} parent=1 // pred_check
      _
    $region19: #{tpu_custom_call.1} parent=1 // pred_check_branch
      %28 = sbr.rel (0) target = $region21
    $region20: #{tpu_custom_call.1} parent=1 // pred_region
      _
    $region21: #{tpu_custom_call.1} parent=1 // pred_fallthru
      _
    // Predicated region
    $region22: #{tpu_custom_call.1} parent=1 // pred_check
      _
    $region23: #{tpu_custom_call.1} parent=1 // pred_check_branch
      %30 = sbr.rel (0) target = $region25
    $region24: #{tpu_custom_call.1} parent=1 // pred_region
      _
    $region25: #{tpu_custom_call.1} parent=1 // pred_fallthru
      _
    // Predicated region
    $region26: #{tpu_custom_call.1} parent=1 // pred_check
      _
    $region27: #{tpu_custom_call.1} parent=1 // pred_check_branch
      %32 = sbr.rel (0) target = $region29
    $region28: #{tpu_custom_call.1} parent=1 // pred_region
      _
    $region29: #{tpu_custom_call.1} parent=1 // pred_fallthru
      _
    // Predicated region
    $region30: #{tpu_custom_call.1} parent=1 // pred_check
      _
    $region31: #{tpu_custom_call.1} parent=1 // pred_check_branch
      %34 = sbr.rel (0) target = $region33
    $region32: #{tpu_custom_call.1} parent=1 // pred_region
      _
    $region33: #{tpu_custom_call.1} parent=1 // pred_fallthru
      _
    // Predicated region
    $region34: #{tpu_custom_call.1} parent=1 // pred_check
      _
    $region35: #{tpu_custom_call.1} parent=1 // pred_check_branch
      %36 = sbr.rel (0) target = $region37
    $region36: #{tpu_custom_call.1} parent=1 // pred_region
      _
    $region37: #{tpu_custom_call.1} parent=1 // pred_fallthru
      _
    // Predicated region
    $region38: #{tpu_custom_call.1} parent=1 // pred_check
      _
    $region39: #{tpu_custom_call.1} parent=1 // pred_check_branch
      %38 = sbr.rel (0) target = $region41
    $region40: #{tpu_custom_call.1} parent=1 // pred_region
      _
    $region41: #{tpu_custom_call.1} parent=1 // pred_fallthru
      _
    // Predicated region
    $region42: #{tpu_custom_call.1} parent=1 // pred_check
      _
    $region43: #{tpu_custom_call.1} parent=1 // pred_check_branch
      %40 = sbr.rel (0) target = $region45
    $region44: #{tpu_custom_call.1} parent=1 // pred_region
      _
    $region45: #{tpu_custom_call.1} parent=1 // pred_fallthru
      _
    %v41 = vld [vmem:[%s0] sm:$0x3]
    %v42 = vld [vmem:[%s2] sm:$0xff]
    %v43 = vld [vmem:[%s2 + $0x8] sm:$0xff]
    %v44 = vld [vmem:[%s2 + $0x10] sm:$0xff]
    %v45 = vld [vmem:[%s2 + $0x18] sm:$0xff]
    %v46 = vld [vmem:[%s1] sm:$0x3]
    %v47 = vld [vmem:[%s3] sm:$0xff]
    %vm48 = vcmask 64512
    %v50 = vsel %vm48, %v46, 0
    %52 = vmatpush.msra.mxu0 0.0
    %53 = vmatpush.msra.mxu0 0.0
    %54 = vmatpush.msra.mxu0 0.0
    %55 = vmatpush.msra.mxu0 0.0
    %56 = vmatpush.msra.mxu0 0.0
    %57 = vmatpush.msra.mxu0 0.0
    %58 = vmatpush.msra.mxu0 0.0
    %59 = vmatpush.msra.mxu0 0.0
    %60 = vmatpush.msra.mxu0 0.0
    %61 = vmatpush.msra.mxu0 0.0
    %62 = vmatpush.msra.mxu0 0.0
    %63 = vmatpush.msra.mxu0 0.0
    %64 = vmatpush.msra.mxu0 0.0
    %65 = vmatpush.msra.mxu0 0.0
    %66 = vmatpush.msra.mxu0 0.0
    %67 = vmatpush.msra.mxu0 %v47
    %68 = vmatmul.f32.gmra.mxu0 %v50
    %v69 = vpop.f32.mrf.mxu0
    %v70 = vadd.f32 0.0, %v69
    %71 = vdwg.mxu0
    %vm72 = vcmask 261120
    %v74 = vsel %vm72, %v41, 0
    %76 = vmatpush.msra.mxu0 0.0
    %77 = vmatpush.msra.mxu0 0.0
    %78 = vmatpush.msra.mxu0 0.0
    %79 = vmatpush.msra.mxu0 0.0
    %80 = vmatpush.msra.mxu0 0.0
    %81 = vmatpush.msra.mxu0 0.0
    %82 = vmatpush.msra.mxu0 0.0
    %83 = vmatpush.msra.mxu0 0.0
    %84 = vmatpush.msra.mxu0 0.0
    %85 = vmatpush.msra.mxu0 0.0
    %86 = vmatpush.msra.mxu0 0.0
    %87 = vmatpush.msra.mxu0 0.0
    %88 = vmatpush.msra.mxu0 %v45
    %89 = vmatpush.msra.mxu0 %v44
    %90 = vmatpush.msra.mxu0 %v43
    %91 = vmatpush.msra.mxu0 %v42
    %92 = vmatmul.f32.gmra.mxu0 %v74
    %v93 = vpop.f32.mrf.mxu0
    %v94 = vadd.f32 %v70, %v93
    %95 = vdwg.mxu0
    %v96 = vld [vmem:[%s4] sm:$0x1]
    %v98 = vperm.slane %v96, 0
    %v100 = vadd.f32 %v94, %v98
    %v101 = vmax.f32 %v100, 0.0
    %v102 = vld [vmem:[%s5] sm:$0xff]
    %v103 = vld [vmem:[%s5 + $0x8] sm:$0xff]
    %v104 = vld [vmem:[%s5 + $0x10] sm:$0xff]
    %v105 = vld [vmem:[%s5 + $0x18] sm:$0xff]
    %v106 = vld [vmem:[%s5 + $0x20] sm:$0xff]
    %v107 = vld [vmem:[%s5 + $0x28] sm:$0xff]
    %v108 = vld [vmem:[%s5 + $0x30] sm:$0xff]
    %v109 = vld [vmem:[%s5 + $0x38] sm:$0xff]
    %v110 = vld [vmem:[%s5 + $0x40] sm:$0xff]
    %v111 = vld [vmem:[%s5 + $0x48] sm:$0xff]
    %v112 = vld [vmem:[%s5 + $0x50] sm:$0xff]
    %v113 = vld [vmem:[%s5 + $0x58] sm:$0xff]
    %v114 = vld [vmem:[%s5 + $0x60] sm:$0xff]
    %v115 = vld [vmem:[%s5 + $0x68] sm:$0xff]
    %v116 = vld [vmem:[%s5 + $0x70] sm:$0xff]
    %v117 = vld [vmem:[%s5 + $0x78] sm:$0xff]
    %s118 = sld [smem:[#allocation2]]
    %v119 = vstv %s118
    %120 = vmatpush.msra.mxu0 %v117
    %121 = vmatpush.msra.mxu0 %v116
    %122 = vmatpush.msra.mxu0 %v115
    %123 = vmatpush.msra.mxu0 %v114
    %124 = vmatpush.msra.mxu0 %v113
    %125 = vmatpush.msra.mxu0 %v112
    %126 = vmatpush.msra.mxu0 %v111
    %127 = vmatpush.msra.mxu0 %v110
    %128 = vmatpush.msra.mxu0 %v109
    %129 = vmatpush.msra.mxu0 %v108
    %130 = vmatpush.msra.mxu0 %v107
    %131 = vmatpush.msra.mxu0 %v106
    %132 = vmatpush.msra.mxu0 %v105
    %133 = vmatpush.msra.mxu0 %v104
    %134 = vmatpush.msra.mxu0 %v103
    %135 = vmatpush.msra.mxu0 %v102
    %136 = vmatmul.f32.gmra.mxu0 %v101
    %v137 = vpop.f32.mrf.mxu0
    %v138 = vadd.f32 %v119, %v137
    %139 = vdwg.mxu0
    %v140 = vld [vmem:[%s6] sm:$0xff]
    %v141 = vld [vmem:[%s6 + $0x8] sm:$0xff]
    %v142 = vld [vmem:[%s7] sm:$0xff]
    %v143 = vld [vmem:[%s7 + $0x8] sm:$0xff]
    %145 = vset.pattern.permute.xlu0 0
    %146 = vperm.xlu0 %145, %v142
    %v147 = vpop.permute.xlu0 %146
    %150 = vset.pattern.permute.xlu0 0
    %151 = vperm.xlu0 %150, %v143
    %v152 = vpop.permute.xlu0 %151
    %v155 = vsel %vm48, %v140, 0
    %v158 = vsel %vm48, %v141, 0
    %v161 = vsel %vm48, %v138, 0
    %163 = vmatpush.xpose.msra.mxu0 0.0
    %164 = vmatpush.xpose.msra.mxu0 0.0
    %165 = vmatpush.xpose.msra.mxu0 0.0
    %166 = vmatpush.xpose.msra.mxu0 0.0
    %167 = vmatpush.xpose.msra.mxu0 0.0
    %168 = vmatpush.xpose.msra.mxu0 0.0
    %169 = vmatpush.xpose.msra.mxu0 0.0
    %170 = vmatpush.xpose.msra.mxu0 0.0
    %171 = vmatpush.xpose.msra.mxu0 0.0
    %172 = vmatpush.xpose.msra.mxu0 0.0
    %173 = vmatpush.xpose.msra.mxu0 0.0
    %174 = vmatpush.xpose.msra.mxu0 0.0
    %175 = vmatpush.xpose.msra.mxu0 0.0
    %176 = vmatpush.xpose.msra.mxu0 0.0
    %177 = vmatpush.xpose.msra.mxu0 0.0
    %178 = vmatpush.xpose.msra.mxu0 %v161
    %179 = vmatmul.f32.gmra.mxu0 %v155
    %v180 = vpop.f32.mrf.mxu0
    %v181 = vadd.f32 %v147, %v180
    %182 = vmatmul.f32.gmra.mxu0 %v158
    %v183 = vpop.f32.mrf.mxu0
    %v184 = vadd.f32 %v152, %v183
    %185 = vdwg.mxu0
    %v186 = vmax.f32 %v181, 0.0
    %v187 = vmax.f32 %v184, 0.0
    %v188 = vld [vmem:[%s8] sm:$0x1]
    %s189 = sld [smem:[#allocation3]]
    %v190 = vstv %s189
    %vm191 = vcmask 130048
    %v193 = vsel %vm191, %v188, 0
    %195 = vmatpush.msra.mxu0 0.0
    %196 = vmatpush.msra.mxu0 0.0
    %197 = vmatpush.msra.mxu0 0.0
    %198 = vmatpush.msra.mxu0 0.0
    %199 = vmatpush.msra.mxu0 0.0
    %200 = vmatpush.msra.mxu0 0.0
    %201 = vmatpush.msra.mxu0 0.0
    %202 = vmatpush.msra.mxu0 0.0
    %203 = vmatpush.msra.mxu0 0.0
    %204 = vmatpush.msra.mxu0 0.0
    %205 = vmatpush.msra.mxu0 0.0
    %206 = vmatpush.msra.mxu0 0.0
    %207 = vmatpush.msra.mxu0 0.0
    %208 = vmatpush.msra.mxu0 0.0
    %209 = vmatpush.msra.mxu0 %v187
    %210 = vmatpush.msra.mxu0 %v186
    %211 = vmatmul.f32.gmra.mxu0 %v193
    %v212 = vpop.f32.mrf.mxu0
    %v213 = vadd.f32 %v190, %v212
    %214 = vdwg.mxu0
    %v215 = vxor.u32 %v213, 2147483648
    %v216 = vmul.f32 %v215, 1.442695
    %v217 = vpow.pop %v216
    %v218 = vadd.f32 %v217, 1.0
    %v219 = vrcp.pop %v218
    %v220 = vmul.f32 %v218, %v219
    %v221 = vsub.f32 1.0, %v220
    %v222 = vmul.f32 %v219, %v221
    %v223 = vadd.f32 %v219, %v222
    %vm224 = vweird.f32 %v218
    %vm225 = vweird.f32 %v219
    %vm226 = vmor %vm224, %vm225
    %v227 = vsel %vm226, %v219, %v223
    %v228 = vand.u32 2147483647, %v218
    %vm229 = vcmp.eq.f32.partialorder %v228, 8.507059e+37
    %v230 = vand.u32 %v218, 2147483648
    %v231 = vor.u32 1.1754944e-38, %v230
    %v232 = vsel %vm229, %v231, %v227
    %v233 = vmul.f32 1.0, %v232
    %vm234 = vcmask 8192
    %235 = vst.msk [vmem:[#allocation4] sm:$0x1] %vm234, %v233
    // Predicated region
    $region46: #{tpu_custom_call.1} parent=1 // pred_check
      _
    $region47: #{tpu_custom_call.1} parent=1 // pred_check_branch
      %237 = sbr.rel (0) target = $region49
    $region48: #{tpu_custom_call.1} parent=1 // pred_region
      %239 = vsyncadd [#allocation5], 0
      %s241 = sshll.u32 [#allocation4], 4
      %s242 = int_to_ptr.vmem [resolvable:$true] %s241
      %s243 = sshll.u32 %s11, 4
      %s244 = int_to_ptr.hbm [resolvable:$true] %s243
      %246 = dma.vmem_to_hbm [thread:$0]  %s242, 16, %s244, [#allocation5]
    $region49: #{tpu_custom_call.1} parent=1 // pred_fallthru
      _
    // Predicated region
    $region50: #{tpu_custom_call.1} parent=1 // pred_check
      _
    $region51: #{tpu_custom_call.1} parent=1 // pred_check_branch
      %248 = sbr.rel (0) target = $region53
    $region52: #{tpu_custom_call.1} parent=1 // pred_region
      %250 = dma.done [#allocation5], 16
    $region53: #{tpu_custom_call.1} parent=1 // pred_fallthru
      _
    %251 = vsyncpa [#allocation5], 1

</llo_original>
